<compile_context>
chip_gen: v7x
topology: tpu7x:2x2x1
jax: 0.10.0
libtpu: 0.0.40
codegen_flags: <defaults>
</compile_context>

<pallas_src>
import jax
import jax.numpy as jnp
from jax import lax
from jax.experimental import pallas as pl
from jax.experimental.pallas import tpu as pltpu

KERNEL_SET = (2, 3, 6, 7)
MAX_K = 7


def _fused_matmul_kernel(x_ref, w_ref, b_ref, o_ref):
    # x_ref: (TN, S*cin)        flattened input window (f32 or bf16)
    # w_ref: (S*cin, cols_p)    packed (Toeplitz-unfolded) conv weights
    # b_ref: (1, cols_p)        f32 bias, tiled over time positions (pad cols = 0)
    # o_ref: (TN, cols_p)       lane-dense output
    acc = jnp.dot(x_ref[...], w_ref[...], preferred_element_type=jnp.float32)
    o_ref[...] = (acc + b_ref[...]).astype(o_ref.dtype)


def _pack_params(weights, biases, cin, CPO, CP, D, cols, cols_p, w_dtype):
    """Build the (S*cin, cols_p) unfolded weight matrix and (1, cols_p) bias row.

    Column layout: (branch, out_channel, time) with time of length CP+1, the last
    time column being the folded-in "+1" zero pad; columns [cols:cols_p] are zero
    lane padding.  Row layout: p*cin + c over the last S input time positions.
    """
    nb = len(KERNEL_SET)
    S = CP + (MAX_K - 1) * D
    # Per-tap reversed weights, branch-stacked: Wr[m, c, b, o] = w_b[o, c, 0, K-1-m]
    # for m < K (taps are right-anchored: tap m sits D*(MAX_K-1-m) before the output).
    Wr = jnp.zeros((MAX_K, cin, nb, CPO), jnp.float32)
    for b, K in enumerate(KERNEL_SET):
        w = weights[b]                                      # (CPO, cin, 1, K)
        wrev = jnp.transpose(w[:, :, 0, ::-1], (2, 1, 0))   # (K, cin, CPO)
        Wr = Wr.at[:K, :, b, :].set(wrev)
    # Toeplitz unfolding over the CP kept output positions (+ one zero pad column).
    Wfull = jnp.zeros((S, cin, nb, CPO, CP + 1), jnp.float32)
    for t in range(CP):
        for m in range(MAX_K):
            p = t + (MAX_K - 1 - m) * D
            Wfull = Wfull.at[p, :, :, :, t].set(Wr[m])
    Wbig = Wfull.reshape(S * cin, cols)

    Bfull = jnp.zeros((nb, CPO, CP + 1), jnp.float32)
    for b in range(nb):
        Bfull = Bfull.at[b, :, :CP].set(
            jnp.broadcast_to(biases[b].astype(jnp.float32)[:, None], (CPO, CP)))
    Bbig = Bfull.reshape(1, cols)

    if cols_p > cols:
        Wbig = jnp.pad(Wbig, ((0, 0), (0, cols_p - cols)))
        Bbig = jnp.pad(Bbig, ((0, 0), (0, cols_p - cols)))
    return Wbig.astype(w_dtype), Bbig


def dilated_inception_forward(x, weights, biases, dilation_factor=2,
                              compute_dtype=jnp.float32, out_dtype=None,
                              core_parallel=False):
    """x: (B, cin, H, W) NCHW float32, like the PyTorch module.

    compute_dtype: dtype fed to the MXU (float32 default for parity; bfloat16 is
      the opt-in throughput mode).  out_dtype: kernel output dtype (default f32).
    core_parallel: request explicit per-TensorCore sharding of the row-tile grid
      axis (useful on v7x with 2 TCs per chip).
    """
    B, cin, H, W = x.shape
    CPO = weights[0].shape[0]          # cout // len(kernel_set)
    CP = CPO                           # temporal positions kept (= x[-1].size(1))
    D = dilation_factor
    nb = len(KERNEL_SET)
    S = CP + (MAX_K - 1) * D
    N = B * H
    cols = nb * CPO * (CP + 1)                     # "+1" temporal pad folded in
    cols_p = max(128, -(-cols // 128) * 128)       # lane-dense (multiple of 128)
    out_dtype = jnp.float32 if out_dtype is None else out_dtype

    if W - D * (MAX_K - 1) < CP:
        # Exactly the configs where the torch module's torch.cat(dim=0) fails.
        raise ValueError(
            "dilated_inception requires W - dilation*6 >= cout/4 "
            f"(got W={W}, dilation={D}, cout/4={CP})")

    # ---- pack parameters ----------------------------------------------------
    Wbig, Bbig = _pack_params(weights, biases, cin, CPO, CP, D, cols, cols_p,
                              compute_dtype)

    # ---- pack input: keep only the last S temporal positions, flatten -------
    xs = x[..., W - S:]                                     # (B, cin, H, S)
    # TODO(synk): this transpose+cast is a materialized XLA pass (~extra x bytes);
    # see module docstring for the planned in-kernel alternative.
    xk = jnp.transpose(xs, (0, 2, 3, 1)).reshape(N, S * cin).astype(compute_dtype)

    # ---- tile the row axis N, sizing against the full VMEM working set ------
    in_bytes = jnp.dtype(compute_dtype).itemsize
    ob = jnp.dtype(out_dtype).itemsize
    Sc = S * cin
    w_bytes = Sc * cols_p * in_bytes               # resident, single-buffered
    b_bytes = cols_p * 4                           # resident f32 bias row
    per_row = 2 * Sc * in_bytes + 2 * cols_p * ob  # double-buffered x + out tiles
    BUDGET = 28 * 1024 * 1024                      # working-set target (all gens)
    avail = max(BUDGET - w_bytes - b_bytes, per_row * 16)
    tn = min(avail // per_row, 2048, -(-N // 128) * 128)
    if tn >= 128:
        TN = (tn // 128) * 128                     # MXU-friendly M dimension
    else:
        TN = max(16, (tn // 16) * 16)              # bf16 sublane packing minimum
    n_pad = -(-N // TN) * TN
    if n_pad > N:
        xk = jnp.pad(xk, ((0, n_pad - N), (0, 0)))

    # vmem limit derived from the actual footprint (2x W covers the fallback path).
    needed = TN * per_row + 2 * w_bytes + 2 * b_bytes + (2 << 20)
    vmem_limit = int(min(64 << 20, max(32 << 20, needed)))

    cost = pl.CostEstimate(
        flops=2 * n_pad * Sc * cols_p,             # actual MXU work (incl. zeros)
        transcendentals=0,
        bytes_accessed=(n_pad * Sc * in_bytes + w_bytes + b_bytes
                        + n_pad * cols_p * ob),
    )

    row_sem = pltpu.CORE_PARALLEL if core_parallel else "parallel"

    def _run(single_buffer_const):
        const_kw = dict(pipeline_mode=pl.Buffered(1)) if single_buffer_const else {}
        return pl.pallas_call(
            _fused_matmul_kernel,
            out_shape=jax.ShapeDtypeStruct((n_pad, cols_p), out_dtype),
            grid=(n_pad // TN,),
            in_specs=[
                pl.BlockSpec((TN, Sc), lambda i: (i, 0)),
                pl.BlockSpec((Sc, cols_p), lambda i: (0, 0), **const_kw),  # resident W
                pl.BlockSpec((1, cols_p), lambda i: (0, 0), **const_kw),   # resident b
            ],
            out_specs=pl.BlockSpec((TN, cols_p), lambda i: (i, 0)),
            compiler_params=pltpu.CompilerParams(
                dimension_semantics=(row_sem,),
                vmem_limit_bytes=vmem_limit),
            cost_estimate=cost,
        )(xk, Wbig, Bbig)

    try:
        out_flat = _run(True)      # single-buffer the grid-invariant operands
    except Exception:
        out_flat = _run(False)     # fallback: default (double-buffered) specs

    # ---- layout glue back to the PyTorch convention --------------------------
    # (N, cols_p) -> (B, H, branch, O, T+1) -> (branch, B, O, H, T+1) -> cat dim 0
    out = out_flat[:N, :cols].reshape(B, H, nb, CPO, CP + 1)
    out = jnp.transpose(out, (2, 0, 3, 1, 4))
    return out.reshape(nb * B, CPO, H, CP + 1)


def reference_forward(x, weights, biases, dilation_factor=2):
    """Plain-JAX transcription of the PyTorch forward, for verification."""
    outs = []
    for i, _K in enumerate(KERNEL_SET):
        y = lax.conv_general_dilated(
            x, weights[i], window_strides=(1, 1), padding="VALID",
            rhs_dilation=(1, dilation_factor),
            dimension_numbers=("NCHW", "OIHW", "NCHW"))
        y = y + biases[i][None, :, None, None]
        outs.append(y)
    cpo = outs[-1].shape[1]                        # x[-1].size(1)
    outs = [t[..., -cpo:] for t in outs]
    max_width = max(t.shape[2] for t in outs) + 1  # size(2) is H -> always pad by 1
    padded = []
    for t in outs:
        if t.shape[2] < max_width:
            pad = max_width - t.shape[2]
            t = jnp.pad(t, ((0, 0), (0, 0), (0, 0), (0, pad)))
        padded.append(t)
    return jnp.concatenate(padded, axis=0)


if __name__ == "__main__":
    B, cin, H, W = 2, 4, 4, 16
    cout = 8                     # -> cout per branch = 2
    CPO = cout // len(KERNEL_SET)
    dilation_factor = 2

    key = jax.random.PRNGKey(0)
    key, xkey = jax.random.split(key)
    x = jax.random.normal(xkey, (B, cin, H, W), jnp.float32)

    # Deterministic parameter init (PyTorch-style uniform bounds).
    weights, biases = [], []
    for K in KERNEL_SET:
        key, wk, bk = jax.random.split(key, 3)
        bound = 1.0 / float((cin * 1 * K) ** 0.5)
        weights.append(jax.random.uniform(wk, (CPO, cin, 1, K), jnp.float32, -bound, bound))
        biases.append(jax.random.uniform(bk, (CPO,), jnp.float32, -bound, bound))

    ref = reference_forward(x, weights, biases, dilation_factor)
    expected_shape = (len(KERNEL_SET) * B, CPO, H, CPO + 1)

    # Default path: f32 operands, f32 output — parity with the PyTorch module.
    out_f32 = jax.block_until_ready(
        dilated_inception_forward(x, weights, biases, dilation_factor))
    assert out_f32.shape == expected_shape, out_f32.shape
    err_f32 = float(jnp.max(jnp.abs(out_f32 - ref)))
    assert err_f32 < 5e-4, f"f32 path max abs error {err_f32}"

    # Opt-in throughput path: bf16 MXU operands + bf16 output.  Compare against
    # the reference evaluated with the same bf16-rounded operands (accumulation
    # is f32 in both); the tolerance also covers the final bf16 output rounding.
    out_bf = jax.block_until_ready(
        dilated_inception_forward(x, weights, biases, dilation_factor,
                                  compute_dtype=jnp.bfloat16,
                                  out_dtype=jnp.bfloat16))
    assert out_bf.shape == expected_shape, out_bf.shape
    assert out_bf.dtype == jnp.bfloat16
    xb = x.astype(jnp.bfloat16).astype(jnp.float32)
    wb = [w.astype(jnp.bfloat16).astype(jnp.float32) for w in weights]
    ref_bf = reference_forward(xb, wb, biases, dilation_factor)
    err_bf = float(jnp.max(jnp.abs(out_bf.astype(jnp.float32) - ref_bf)))
    assert err_bf < 3e-2, f"bf16 path max abs error {err_bf}"

    print("KERNEL_OK")
</pallas_src>

<mosaic_0001>
module attributes {stable_mosaic.version = 11 : i64} {
  func.func @_fused_matmul_kernel(%arg0: i32, %arg1: memref<128x56xf32, #tpu.memory_space<vmem>>, %arg2: memref<56x128xf32, #tpu.memory_space<vmem>>, %arg3: memref<1x128xf32, #tpu.memory_space<vmem>>, %arg4: memref<128x128xf32, #tpu.memory_space<vmem>>) attributes {dimension_semantics = [#tpu.dimension_semantics<parallel>], iteration_bounds = array<i64: 1>, scalar_prefetch = 0 : i64, scratch_operands = 0 : i64, tpu.core_type = #tpu.core_type<tc>, window_params = [{transform_indices = @transform_0, window_bounds = array<i64: 128, 56>}, {pipeline_mode = #tpu.pipeline_mode<synchronous>, transform_indices = @transform_1, window_bounds = array<i64: 56, 128>}, {pipeline_mode = #tpu.pipeline_mode<synchronous>, transform_indices = @transform_2, window_bounds = array<i64: 1, 128>}, {transform_indices = @transform_3, window_bounds = array<i64: 128, 128>}]} {
    %c0 = arith.constant 0 : index
    %c0_0 = arith.constant 0 : index
    %0 = vector.load %arg1[%c0, %c0_0] : memref<128x56xf32, #tpu.memory_space<vmem>>, vector<128x56xf32>
    %c0_1 = arith.constant 0 : index
    %c0_2 = arith.constant 0 : index
    %1 = vector.load %arg2[%c0_1, %c0_2] : memref<56x128xf32, #tpu.memory_space<vmem>>, vector<56x128xf32>
    %cst = arith.constant dense<0.000000e+00> : vector<128x128xf32>
    %2 = tpu.matmul %0, %1, %cst {dimension_numbers = #tpu.dot_dimension_numbers<[1], [0], [0], [1], [0, 0, 1, 1], [], []>} : vector<128x56xf32>, vector<56x128xf32>, vector<128x128xf32> -> vector<128x128xf32>
    %c0_3 = arith.constant 0 : index
    %c0_4 = arith.constant 0 : index
    %3 = vector.load %arg3[%c0_3, %c0_4] : memref<1x128xf32, #tpu.memory_space<vmem>>, vector<1x128xf32>
    %4 = vector.broadcast %3 : vector<1x128xf32> to vector<128x128xf32>
    %5 = arith.addf %2, %4 : vector<128x128xf32>
    %c0_5 = arith.constant 0 : index
    %c0_6 = arith.constant 0 : index
    %6 = vector.load %arg4[%c0_5, %c0_6] : memref<128x128xf32, #tpu.memory_space<vmem>>, vector<128x128xf32>
    tpu.vector_store %arg4[%c0_5, %c0_6], %5 {strides = array<i32>} : memref<128x128xf32, #tpu.memory_space<vmem>>, vector<128x128xf32>,
    return
  }
  func.func @transform_0(%arg0: i32) -> (i32, i32) {
    %c0_i32 = arith.constant 0 : i32
    %c0_i32_0 = arith.constant 0 : i32
    return %arg0, %c0_i32 : i32, i32
  }
  func.func @transform_1(%arg0: i32) -> (i32, i32) {
    %c0_i32 = arith.constant 0 : i32
    %c0_i32_0 = arith.constant 0 : i32
    %c0_i32_1 = arith.constant 0 : i32
    return %c0_i32, %c0_i32_0 : i32, i32
  }
  func.func @transform_2(%arg0: i32) -> (i32, i32) {
    %c0_i32 = arith.constant 0 : i32
    %c0_i32_0 = arith.constant 0 : i32
    %c0_i32_1 = arith.constant 0 : i32
    return %c0_i32, %c0_i32_0 : i32, i32
  }
  func.func @transform_3(%arg0: i32) -> (i32, i32) {
    %c0_i32 = arith.constant 0 : i32
    %c0_i32_0 = arith.constant 0 : i32
    return %arg0, %c0_i32 : i32, i32
  }
}

module attributes {stable_mosaic.version = 11 : i64} {
  func.func @_fused_matmul_kernel(%arg0: i32, %arg1: memref<128x56xf32, #tpu.memory_space<vmem>>, %arg2: memref<56x128xf32, #tpu.memory_space<vmem>>, %arg3: memref<1x128xf32, #tpu.memory_space<vmem>>, %arg4: memref<128x128xf32, #tpu.memory_space<vmem>>) attributes {dimension_semantics = [#tpu.dimension_semantics<parallel>], iteration_bounds = array<i64: 1>, scalar_prefetch = 0 : i64, scratch_operands = 0 : i64, tpu.core_type = #tpu.core_type<tc>, window_params = [{transform_indices = @transform_0, window_bounds = array<i64: 128, 56>}, {pipeline_mode = #tpu.pipeline_mode<synchronous>, transform_indices = @transform_1, window_bounds = array<i64: 56, 128>}, {pipeline_mode = #tpu.pipeline_mode<synchronous>, transform_indices = @transform_2, window_bounds = array<i64: 1, 128>}, {transform_indices = @transform_3, window_bounds = array<i64: 128, 128>}]} {
    %c0 = arith.constant 0 : index
    %c0_0 = arith.constant 0 : index
    %0 = vector.load %arg1[%c0, %c0_0] : memref<128x56xf32, #tpu.memory_space<vmem>>, vector<128x56xf32>
    %c0_1 = arith.constant 0 : index
    %c0_2 = arith.constant 0 : index
    %1 = vector.load %arg2[%c0_1, %c0_2] : memref<56x128xf32, #tpu.memory_space<vmem>>, vector<56x128xf32>
    %cst = arith.constant dense<0.000000e+00> : vector<128x128xf32>
    %2 = tpu.matmul %0, %1, %cst {dimension_numbers = #tpu.dot_dimension_numbers<[1], [0], [0], [1], [0, 0, 1, 1], [], []>} : vector<128x56xf32>, vector<56x128xf32>, vector<128x128xf32> -> vector<128x128xf32>
    %c0_3 = arith.constant 0 : index
    %c0_4 = arith.constant 0 : index
    %3 = vector.load %arg3[%c0_3, %c0_4] : memref<1x128xf32, #tpu.memory_space<vmem>>, vector<1x128xf32>
    %4 = vector.broadcast %3 : vector<1x128xf32> to vector<128x128xf32>
    %5 = arith.addf %2, %4 : vector<128x128xf32>
    %c0_5 = arith.constant 0 : index
    %c0_6 = arith.constant 0 : index
    %6 = vector.load %arg4[%c0_5, %c0_6] : memref<128x128xf32, #tpu.memory_space<vmem>>, vector<128x128xf32>
    tpu.vector_store %arg4[%c0_5, %c0_6], %5 {strides = array<i32>} : memref<128x128xf32, #tpu.memory_space<vmem>>, vector<128x128xf32>,
    return
  }
  func.func @transform_0(%arg0: i32) -> (i32, i32) {
    %c0_i32 = arith.constant 0 : i32
    %c0_i32_0 = arith.constant 0 : i32
    return %arg0, %c0_i32 : i32, i32
  }
  func.func @transform_1(%arg0: i32) -> (i32, i32) {
    %c0_i32 = arith.constant 0 : i32
    %c0_i32_0 = arith.constant 0 : i32
    %c0_i32_1 = arith.constant 0 : i32
    return %c0_i32, %c0_i32_0 : i32, i32
  }
  func.func @transform_2(%arg0: i32) -> (i32, i32) {
    %c0_i32 = arith.constant 0 : i32
    %c0_i32_0 = arith.constant 0 : i32
    %c0_i32_1 = arith.constant 0 : i32
    return %c0_i32, %c0_i32_0 : i32, i32
  }
  func.func @transform_3(%arg0: i32) -> (i32, i32) {
    %c0_i32 = arith.constant 0 : i32
    %c0_i32_0 = arith.constant 0 : i32
    return %arg0, %c0_i32 : i32, i32
  }
}

</mosaic_0001>

<llo_original>
// kernel: tpu_custom_call.1
$region0: #{tpu_custom_call.1}
  #allocation0 [shape = 'u32[]', space=smem, size = 0x4, offset = 0x4, fixed_abs, tag = 'smem constant byte address 0x4 - core index']
  #allocation1 [shape = 'u32[144,128]{1,0:T(1,128)}', space=vmem, size = 0x12000, scoped, tag = 'internal scratch']
  %s0 = inlined_call_operand.vmem [shape: f32[128,56], index: 0, kind: input, shape index: {}]
  %s1 = inlined_call_operand.vmem [shape: f32[56,128], index: 1, kind: input, shape index: {}]
  %s2 = inlined_call_operand.vmem [shape: f32[1,128], index: 2, kind: input, shape index: {}]
  %s3 = inlined_call_operand.hbm [shape: f32[128,128], index: 3, kind: output, shape index: {}]
  %s4 = sld [smem:[#allocation0]]
  $region22: #{tpu_custom_call.1} parent=0
    _
  %s6 = ssub.s32 1, %s4
  %s7 = scalar_select 0, %s6, %s4
  $region1: #{tpu_custom_call.1} parent=0
    #allocation2 [shape = 'u8[65536]{0}', space=vmem, size = 0x10000, scoped, tag = 'output window, operand 0, single buffered']
    #allocation3 [shape = 's32[1]{0}', space=sflag, size = 0x4, scoped, tag = 'scoped memory for tpu_custom_call.1']
    %8 = vsyncpa [#allocation3], 0
    // Predicated region
    $region2: #{tpu_custom_call.1} parent=1 // pred_check
      _
    $region3: #{tpu_custom_call.1} parent=1 // pred_check_branch
      %10 = sbr.rel (0) target = $region5
    $region4: #{tpu_custom_call.1} parent=1 // pred_region
      _
    $region5: #{tpu_custom_call.1} parent=1 // pred_fallthru
      _
    // Predicated region
    $region6: #{tpu_custom_call.1} parent=1 // pred_check
      _
    $region7: #{tpu_custom_call.1} parent=1 // pred_check_branch
      %12 = sbr.rel (0) target = $region9
    $region8: #{tpu_custom_call.1} parent=1 // pred_region
      _
    $region9: #{tpu_custom_call.1} parent=1 // pred_fallthru
      _
    // Predicated region
    $region10: #{tpu_custom_call.1} parent=1 // pred_check
      _
    $region11: #{tpu_custom_call.1} parent=1 // pred_check_branch
      %14 = sbr.rel (0) target = $region13
    $region12: #{tpu_custom_call.1} parent=1 // pred_region
      _
    $region13: #{tpu_custom_call.1} parent=1 // pred_fallthru
      _
    %v15 = vld [vmem:[%s0] sm:$0xff]
    %v16 = vld [vmem:[%s0 + $0x8] sm:$0xff]
    %v17 = vld [vmem:[%s0 + $0x10] sm:$0xff]
    %v18 = vld [vmem:[%s0 + $0x18] sm:$0xff]
    %v19 = vld [vmem:[%s0 + $0x20] sm:$0xff]
    %v20 = vld [vmem:[%s0 + $0x28] sm:$0xff]
    %v21 = vld [vmem:[%s0 + $0x30] sm:$0xff]
    %v22 = vld [vmem:[%s0 + $0x38] sm:$0xff]
    %v23 = vld [vmem:[%s0 + $0x40] sm:$0xff]
    %v24 = vld [vmem:[%s0 + $0x48] sm:$0xff]
    %v25 = vld [vmem:[%s0 + $0x50] sm:$0xff]
    %v26 = vld [vmem:[%s0 + $0x58] sm:$0xff]
    %v27 = vld [vmem:[%s0 + $0x60] sm:$0xff]
    %v28 = vld [vmem:[%s0 + $0x68] sm:$0xff]
    %v29 = vld [vmem:[%s0 + $0x70] sm:$0xff]
    %v30 = vld [vmem:[%s0 + $0x78] sm:$0xff]
    %v31 = vld [vmem:[%s1] sm:$0xff]
    %v32 = vld [vmem:[%s1 + $0x8] sm:$0xff]
    %v33 = vld [vmem:[%s1 + $0x10] sm:$0xff]
    %v34 = vld [vmem:[%s1 + $0x18] sm:$0xff]
    %v35 = vld [vmem:[%s1 + $0x20] sm:$0xff]
    %v36 = vld [vmem:[%s1 + $0x28] sm:$0xff]
    %v37 = vld [vmem:[%s1 + $0x30] sm:$0xff]
    %v38 = vld [vmem:[%s2] sm:$0x1]
    %v40 = vlaneseq
    %v41 = vshrl.u32 %v40, 7
    %v42 = vsub.s32 0, %v41
    %v43 = vrot.slane %v38, %v42
    %vm45 = vcmask 457728
    %v47 = vsel %vm45, %v15, 0
    %v50 = vsel %vm45, %v16, 0
    %v53 = vsel %vm45, %v17, 0
    %v56 = vsel %vm45, %v18, 0
    %v59 = vsel %vm45, %v19, 0
    %v62 = vsel %vm45, %v20, 0
    %v65 = vsel %vm45, %v21, 0
    %v68 = vsel %vm45, %v22, 0
    %v71 = vsel %vm45, %v23, 0
    %v74 = vsel %vm45, %v24, 0
    %v77 = vsel %vm45, %v25, 0
    %v80 = vsel %vm45, %v26, 0
    %v83 = vsel %vm45, %v27, 0
    %v86 = vsel %vm45, %v28, 0
    %v89 = vsel %vm45, %v29, 0
    %v92 = vsel %vm45, %v30, 0
    %94 = vmatprep.subr.mxu0 0.0
    %95 = vmatpush1.msra.mxu0 %v31
    %96 = vmatprep.subr.mxu0 0.0
    %97 = vmatpush1.msra.mxu0 %v32
    %98 = vmatprep.subr.mxu0 0.0
    %99 = vmatpush1.msra.mxu0 %v33
    %100 = vmatprep.subr.mxu0 0.0
    %101 = vmatpush1.msra.mxu0 %v34
    %102 = vmatprep.subr.mxu0 0.0
    %103 = vmatpush1.msra.mxu0 %v35
    %104 = vmatprep.subr.mxu0 0.0
    %105 = vmatpush1.msra.mxu0 %v36
    %106 = vmatprep.subr.mxu0 0.0
    %107 = vmatpush1.msra.mxu0 %v37
    %108 = vmatprep.subr.mxu0 0.0
    %109 = vmatpush1.msra.mxu0 0.0
    %110 = vmatprep.subr.mxu0 0.0
    %111 = vmatpush1.msra.mxu0 0.0
    %112 = vmatprep.subr.mxu0 0.0
    %113 = vmatpush1.msra.mxu0 0.0
    %114 = vmatprep.subr.mxu0 0.0
    %115 = vmatpush1.msra.mxu0 0.0
    %116 = vmatprep.subr.mxu0 0.0
    %117 = vmatpush1.msra.mxu0 0.0
    %118 = vmatprep.subr.mxu0 0.0
    %119 = vmatpush1.msra.mxu0 0.0
    %120 = vmatprep.subr.mxu0 0.0
    %121 = vmatpush1.msra.mxu0 0.0
    %122 = vmatprep.subr.mxu0 0.0
    %123 = vmatpush1.msra.mxu0 0.0
    %124 = vmatprep.subr.mxu0 0.0
    %125 = vmatpush1.msra.mxu0 0.0
    %126 = vmatprep.subr.mxu0 0.0
    %127 = vmatpush1.msra.mxu0 0.0
    %128 = vmatprep.subr.mxu0 0.0
    %129 = vmatpush1.msra.mxu0 0.0
    %130 = vmatprep.subr.mxu0 0.0
    %131 = vmatpush1.msra.mxu0 0.0
    %132 = vmatprep.subr.mxu0 0.0
    %133 = vmatpush1.msra.mxu0 0.0
    %134 = vmatprep.subr.mxu0 0.0
    %135 = vmatpush1.msra.mxu0 0.0
    %136 = vmatprep.subr.mxu0 0.0
    %137 = vmatpush1.msra.mxu0 0.0
    %138 = vmatprep.subr.mxu0 0.0
    %139 = vmatpush1.msra.mxu0 0.0
    %140 = vmatprep.subr.mxu0 0.0
    %141 = vmatpush1.msra.mxu0 0.0
    %142 = vmatprep.subr.mxu0 0.0
    %143 = vmatpush1.msra.mxu0 0.0
    %144 = vmatprep.subr.mxu0 0.0
    %145 = vmatpush1.msra.mxu0 0.0
    %146 = vmatprep.subr.mxu0 0.0
    %147 = vmatpush1.msra.mxu0 0.0
    %148 = vmatprep.subr.mxu0 0.0
    %149 = vmatpush1.msra.mxu0 0.0
    %150 = vmatprep.subr.mxu0 0.0
    %151 = vmatpush1.msra.mxu0 0.0
    %152 = vmatprep.subr.mxu0 0.0
    %153 = vmatpush1.msra.mxu0 0.0
    %154 = vmatprep.subr.mxu0 0.0
    %155 = vmatpush1.msra.mxu0 0.0
    %156 = vmatprep.subr.mxu0 0.0
    %157 = vmatpush1.msra.mxu0 0.0
    %158 = vmatprep.mubr.f32.mxu0 0.0
    %159 = vmatmul.mubr.f32.gmra.mrb[0].mxu0 %v47
    %v160 = vpop.f32.mrb[0].mxu0
    %v161 = vadd.f32 %v43, %v160
    %v162 = vpop.f32.mrb[0].mxu0
    %163 = vmatprep.mubr.f32.mxu0 0.0
    %164 = vmatmul.mubr.f32.gmra.mrb[0].mxu0 %v50
    %v165 = vpop.f32.mrb[0].mxu0
    %v166 = vadd.f32 %v43, %v165
    %v167 = vpop.f32.mrb[0].mxu0
    %168 = vmatprep.mubr.f32.mxu0 0.0
    %169 = vmatmul.mubr.f32.gmra.mrb[0].mxu0 %v53
    %v170 = vpop.f32.mrb[0].mxu0
    %v171 = vadd.f32 %v43, %v170
    %v172 = vpop.f32.mrb[0].mxu0
    %173 = vmatprep.mubr.f32.mxu0 0.0
    %174 = vmatmul.mubr.f32.gmra.mrb[0].mxu0 %v56
    %v175 = vpop.f32.mrb[0].mxu0
    %v176 = vadd.f32 %v43, %v175
    %v177 = vpop.f32.mrb[0].mxu0
    %178 = vmatprep.mubr.f32.mxu0 0.0
    %179 = vmatmul.mubr.f32.gmra.mrb[0].mxu0 %v59
    %v180 = vpop.f32.mrb[0].mxu0
    %v181 = vadd.f32 %v43, %v180
    %v182 = vpop.f32.mrb[0].mxu0
    %183 = vmatprep.mubr.f32.mxu0 0.0
    %184 = vmatmul.mubr.f32.gmra.mrb[0].mxu0 %v62
    %v185 = vpop.f32.mrb[0].mxu0
    %v186 = vadd.f32 %v43, %v185
    %v187 = vpop.f32.mrb[0].mxu0
    %188 = vmatprep.mubr.f32.mxu0 0.0
    %189 = vmatmul.mubr.f32.gmra.mrb[0].mxu0 %v65
    %v190 = vpop.f32.mrb[0].mxu0
    %v191 = vadd.f32 %v43, %v190
    %v192 = vpop.f32.mrb[0].mxu0
    %193 = vmatprep.mubr.f32.mxu0 0.0
    %194 = vmatmul.mubr.f32.gmra.mrb[0].mxu0 %v68
    %v195 = vpop.f32.mrb[0].mxu0
    %v196 = vadd.f32 %v43, %v195
    %v197 = vpop.f32.mrb[0].mxu0
    %198 = vmatprep.mubr.f32.mxu0 0.0
    %199 = vmatmul.mubr.f32.gmra.mrb[0].mxu0 %v71
    %v200 = vpop.f32.mrb[0].mxu0
    %v201 = vadd.f32 %v43, %v200
    %v202 = vpop.f32.mrb[0].mxu0
    %203 = vmatprep.mubr.f32.mxu0 0.0
    %204 = vmatmul.mubr.f32.gmra.mrb[0].mxu0 %v74
    %v205 = vpop.f32.mrb[0].mxu0
    %v206 = vadd.f32 %v43, %v205
    %v207 = vpop.f32.mrb[0].mxu0
    %208 = vmatprep.mubr.f32.mxu0 0.0
    %209 = vmatmul.mubr.f32.gmra.mrb[0].mxu0 %v77
    %v210 = vpop.f32.mrb[0].mxu0
    %v211 = vadd.f32 %v43, %v210
    %v212 = vpop.f32.mrb[0].mxu0
    %213 = vmatprep.mubr.f32.mxu0 0.0
    %214 = vmatmul.mubr.f32.gmra.mrb[0].mxu0 %v80
    %v215 = vpop.f32.mrb[0].mxu0
    %v216 = vadd.f32 %v43, %v215
    %v217 = vpop.f32.mrb[0].mxu0
    %218 = vmatprep.mubr.f32.mxu0 0.0
    %219 = vmatmul.mubr.f32.gmra.mrb[0].mxu0 %v83
    %v220 = vpop.f32.mrb[0].mxu0
    %v221 = vadd.f32 %v43, %v220
    %v222 = vpop.f32.mrb[0].mxu0
    %223 = vmatprep.mubr.f32.mxu0 0.0
    %224 = vmatmul.mubr.f32.gmra.mrb[0].mxu0 %v86
    %v225 = vpop.f32.mrb[0].mxu0
    %v226 = vadd.f32 %v43, %v225
    %v227 = vpop.f32.mrb[0].mxu0
    %228 = vmatprep.mubr.f32.mxu0 0.0
    %229 = vmatmul.mubr.f32.gmra.mrb[0].mxu0 %v89
    %v230 = vpop.f32.mrb[0].mxu0
    %v231 = vadd.f32 %v43, %v230
    %v232 = vpop.f32.mrb[0].mxu0
    %233 = vmatprep.mubr.f32.mxu0 0.0
    %234 = vmatmul.mubr.f32.gmra.mrb[0].mxu0 %v92
    %v235 = vpop.f32.mrb[0].mxu0
    %v236 = vadd.f32 %v43, %v235
    %v237 = vpop.f32.mrb[0].mxu0
    %238 = vdwg.mxu0
    %239 = vst [vmem:[#allocation2] sm:$0xff] %v161
    %240 = vst [vmem:[#allocation2 + $0x8] sm:$0xff] %v166
    %241 = vst [vmem:[#allocation2 + $0x10] sm:$0xff] %v171
    %242 = vst [vmem:[#allocation2 + $0x18] sm:$0xff] %v176
    %243 = vst [vmem:[#allocation2 + $0x20] sm:$0xff] %v181
    %244 = vst [vmem:[#allocation2 + $0x28] sm:$0xff] %v186
    %245 = vst [vmem:[#allocation2 + $0x30] sm:$0xff] %v191
    %246 = vst [vmem:[#allocation2 + $0x38] sm:$0xff] %v196
    %247 = vst [vmem:[#allocation2 + $0x40] sm:$0xff] %v201
    %248 = vst [vmem:[#allocation2 + $0x48] sm:$0xff] %v206
    %249 = vst [vmem:[#allocation2 + $0x50] sm:$0xff] %v211
    %250 = vst [vmem:[#allocation2 + $0x58] sm:$0xff] %v216
    %251 = vst [vmem:[#allocation2 + $0x60] sm:$0xff] %v221
    %252 = vst [vmem:[#allocation2 + $0x68] sm:$0xff] %v226
    %253 = vst [vmem:[#allocation2 + $0x70] sm:$0xff] %v231
    %254 = vst [vmem:[#allocation2 + $0x78] sm:$0xff] %v236
    // Predicated region
    $region14: #{tpu_custom_call.1} parent=1 // pred_check
      _
    $region15: #{tpu_custom_call.1} parent=1 // pred_check_branch
      %256 = sbr.rel (0) target = $region17
    $region16: #{tpu_custom_call.1} parent=1 // pred_region
      %s258 = ssub.s32 2048, 2048
      %259 = vsyncadd [#allocation3], %s258
      %s260 = sshll.u32 [#allocation2], 4
      %s261 = int_to_ptr.vmem [resolvable:$true] %s260
      %266 = dma.vmem_to_hbm [thread:$0]  %s261, 2048, %s3, [#allocation3], 128, 128, 8
    $region17: #{tpu_custom_call.1} parent=1 // pred_fallthru
      _
    // Predicated region
    $region18: #{tpu_custom_call.1} parent=1 // pred_check
      _
    $region19: #{tpu_custom_call.1} parent=1 // pred_check_branch
      %268 = sbr.rel (0) target = $region21
    $region20: #{tpu_custom_call.1} parent=1 // pred_region
      %269 = dma.done [#allocation3], 2048
    $region21: #{tpu_custom_call.1} parent=1 // pred_fallthru
      _
    %270 = vsyncpa [#allocation3], 1

// kernel: tpu_custom_call.1
$region0: #{tpu_custom_call.1}
  #allocation0 [shape = 'u32[]', space=smem, size = 0x4, offset = 0x4, fixed_abs, tag = 'smem constant byte address 0x4 - core index']
  #allocation1 [shape = 'u32[144,128]{1,0:T(1,128)}', space=vmem, size = 0x12000, scoped, tag = 'internal scratch']
  %s0 = inlined_call_operand.vmem [shape: f32[128,56], index: 0, kind: input, shape index: {}]
  %s1 = inlined_call_operand.vmem [shape: f32[56,128], index: 1, kind: input, shape index: {}]
  %s2 = inlined_call_operand.vmem [shape: f32[1,128], index: 2, kind: input, shape index: {}]
  %s3 = inlined_call_operand.hbm [shape: f32[128,128], index: 3, kind: output, shape index: {}]
  %s4 = sld [smem:[#allocation0]]
  $region22: #{tpu_custom_call.1} parent=0
    _
  %s6 = ssub.s32 1, %s4
  %s7 = scalar_select 0, %s6, %s4
  $region1: #{tpu_custom_call.1} parent=0
    #allocation2 [shape = 'u8[65536]{0}', space=vmem, size = 0x10000, scoped, tag = 'output window, operand 0, single buffered']
    #allocation3 [shape = 's32[1]{0}', space=sflag, size = 0x4, scoped, tag = 'scoped memory for tpu_custom_call.1']
    %8 = vsyncpa [#allocation3], 0
    // Predicated region
    $region2: #{tpu_custom_call.1} parent=1 // pred_check
      _
    $region3: #{tpu_custom_call.1} parent=1 // pred_check_branch
      %10 = sbr.rel (0) target = $region5
    $region4: #{tpu_custom_call.1} parent=1 // pred_region
      _
    $region5: #{tpu_custom_call.1} parent=1 // pred_fallthru
      _
    // Predicated region
    $region6: #{tpu_custom_call.1} parent=1 // pred_check
      _
    $region7: #{tpu_custom_call.1} parent=1 // pred_check_branch
      %12 = sbr.rel (0) target = $region9
    $region8: #{tpu_custom_call.1} parent=1 // pred_region
      _
    $region9: #{tpu_custom_call.1} parent=1 // pred_fallthru
      _
    // Predicated region
    $region10: #{tpu_custom_call.1} parent=1 // pred_check
      _
    $region11: #{tpu_custom_call.1} parent=1 // pred_check_branch
      %14 = sbr.rel (0) target = $region13
    $region12: #{tpu_custom_call.1} parent=1 // pred_region
      _
    $region13: #{tpu_custom_call.1} parent=1 // pred_fallthru
      _
    %v15 = vld [vmem:[%s0] sm:$0xff]
    %v16 = vld [vmem:[%s0 + $0x8] sm:$0xff]
    %v17 = vld [vmem:[%s0 + $0x10] sm:$0xff]
    %v18 = vld [vmem:[%s0 + $0x18] sm:$0xff]
    %v19 = vld [vmem:[%s0 + $0x20] sm:$0xff]
    %v20 = vld [vmem:[%s0 + $0x28] sm:$0xff]
    %v21 = vld [vmem:[%s0 + $0x30] sm:$0xff]
    %v22 = vld [vmem:[%s0 + $0x38] sm:$0xff]
    %v23 = vld [vmem:[%s0 + $0x40] sm:$0xff]
    %v24 = vld [vmem:[%s0 + $0x48] sm:$0xff]
    %v25 = vld [vmem:[%s0 + $0x50] sm:$0xff]
    %v26 = vld [vmem:[%s0 + $0x58] sm:$0xff]
    %v27 = vld [vmem:[%s0 + $0x60] sm:$0xff]
    %v28 = vld [vmem:[%s0 + $0x68] sm:$0xff]
    %v29 = vld [vmem:[%s0 + $0x70] sm:$0xff]
    %v30 = vld [vmem:[%s0 + $0x78] sm:$0xff]
    %v31 = vld [vmem:[%s1] sm:$0xff]
    %v32 = vld [vmem:[%s1 + $0x8] sm:$0xff]
    %v33 = vld [vmem:[%s1 + $0x10] sm:$0xff]
    %v34 = vld [vmem:[%s1 + $0x18] sm:$0xff]
    %v35 = vld [vmem:[%s1 + $0x20] sm:$0xff]
    %v36 = vld [vmem:[%s1 + $0x28] sm:$0xff]
    %v37 = vld [vmem:[%s1 + $0x30] sm:$0xff]
    %v38 = vld [vmem:[%s2] sm:$0x1]
    %v40 = vlaneseq
    %v41 = vshrl.u32 %v40, 7
    %v42 = vsub.s32 0, %v41
    %v43 = vrot.slane %v38, %v42
    %vm45 = vcmask 457728
    %v47 = vsel %vm45, %v15, 0
    %v50 = vsel %vm45, %v16, 0
    %v53 = vsel %vm45, %v17, 0
    %v56 = vsel %vm45, %v18, 0
    %v59 = vsel %vm45, %v19, 0
    %v62 = vsel %vm45, %v20, 0
    %v65 = vsel %vm45, %v21, 0
    %v68 = vsel %vm45, %v22, 0
    %v71 = vsel %vm45, %v23, 0
    %v74 = vsel %vm45, %v24, 0
    %v77 = vsel %vm45, %v25, 0
    %v80 = vsel %vm45, %v26, 0
    %v83 = vsel %vm45, %v27, 0
    %v86 = vsel %vm45, %v28, 0
    %v89 = vsel %vm45, %v29, 0
    %v92 = vsel %vm45, %v30, 0
    %94 = vmatprep.subr.mxu0 0.0
    %95 = vmatpush1.msra.mxu0 %v31
    %96 = vmatprep.subr.mxu0 0.0
    %97 = vmatpush1.msra.mxu0 %v32
    %98 = vmatprep.subr.mxu0 0.0
    %99 = vmatpush1.msra.mxu0 %v33
    %100 = vmatprep.subr.mxu0 0.0
    %101 = vmatpush1.msra.mxu0 %v34
    %102 = vmatprep.subr.mxu0 0.0
    %103 = vmatpush1.msra.mxu0 %v35
    %104 = vmatprep.subr.mxu0 0.0
    %105 = vmatpush1.msra.mxu0 %v36
    %106 = vmatprep.subr.mxu0 0.0
    %107 = vmatpush1.msra.mxu0 %v37
    %108 = vmatprep.subr.mxu0 0.0
    %109 = vmatpush1.msra.mxu0 0.0
    %110 = vmatprep.subr.mxu0 0.0
    %111 = vmatpush1.msra.mxu0 0.0
    %112 = vmatprep.subr.mxu0 0.0
    %113 = vmatpush1.msra.mxu0 0.0
    %114 = vmatprep.subr.mxu0 0.0
    %115 = vmatpush1.msra.mxu0 0.0
    %116 = vmatprep.subr.mxu0 0.0
    %117 = vmatpush1.msra.mxu0 0.0
    %118 = vmatprep.subr.mxu0 0.0
    %119 = vmatpush1.msra.mxu0 0.0
    %120 = vmatprep.subr.mxu0 0.0
    %121 = vmatpush1.msra.mxu0 0.0
    %122 = vmatprep.subr.mxu0 0.0
    %123 = vmatpush1.msra.mxu0 0.0
    %124 = vmatprep.subr.mxu0 0.0
    %125 = vmatpush1.msra.mxu0 0.0
    %126 = vmatprep.subr.mxu0 0.0
    %127 = vmatpush1.msra.mxu0 0.0
    %128 = vmatprep.subr.mxu0 0.0
    %129 = vmatpush1.msra.mxu0 0.0
    %130 = vmatprep.subr.mxu0 0.0
    %131 = vmatpush1.msra.mxu0 0.0
    %132 = vmatprep.subr.mxu0 0.0
    %133 = vmatpush1.msra.mxu0 0.0
    %134 = vmatprep.subr.mxu0 0.0
    %135 = vmatpush1.msra.mxu0 0.0
    %136 = vmatprep.subr.mxu0 0.0
    %137 = vmatpush1.msra.mxu0 0.0
    %138 = vmatprep.subr.mxu0 0.0
    %139 = vmatpush1.msra.mxu0 0.0
    %140 = vmatprep.subr.mxu0 0.0
    %141 = vmatpush1.msra.mxu0 0.0
    %142 = vmatprep.subr.mxu0 0.0
    %143 = vmatpush1.msra.mxu0 0.0
    %144 = vmatprep.subr.mxu0 0.0
    %145 = vmatpush1.msra.mxu0 0.0
    %146 = vmatprep.subr.mxu0 0.0
    %147 = vmatpush1.msra.mxu0 0.0
    %148 = vmatprep.subr.mxu0 0.0
    %149 = vmatpush1.msra.mxu0 0.0
    %150 = vmatprep.subr.mxu0 0.0
    %151 = vmatpush1.msra.mxu0 0.0
    %152 = vmatprep.subr.mxu0 0.0
    %153 = vmatpush1.msra.mxu0 0.0
    %154 = vmatprep.subr.mxu0 0.0
    %155 = vmatpush1.msra.mxu0 0.0
    %156 = vmatprep.subr.mxu0 0.0
    %157 = vmatpush1.msra.mxu0 0.0
    %158 = vmatprep.mubr.f32.mxu0 0.0
    %159 = vmatmul.mubr.f32.gmra.mrb[0].mxu0 %v47
    %v160 = vpop.f32.mrb[0].mxu0
    %v161 = vadd.f32 %v43, %v160
    %v162 = vpop.f32.mrb[0].mxu0
    %163 = vmatprep.mubr.f32.mxu0 0.0
    %164 = vmatmul.mubr.f32.gmra.mrb[0].mxu0 %v50
    %v165 = vpop.f32.mrb[0].mxu0
    %v166 = vadd.f32 %v43, %v165
    %v167 = vpop.f32.mrb[0].mxu0
    %168 = vmatprep.mubr.f32.mxu0 0.0
    %169 = vmatmul.mubr.f32.gmra.mrb[0].mxu0 %v53
    %v170 = vpop.f32.mrb[0].mxu0
    %v171 = vadd.f32 %v43, %v170
    %v172 = vpop.f32.mrb[0].mxu0
    %173 = vmatprep.mubr.f32.mxu0 0.0
    %174 = vmatmul.mubr.f32.gmra.mrb[0].mxu0 %v56
    %v175 = vpop.f32.mrb[0].mxu0
    %v176 = vadd.f32 %v43, %v175
    %v177 = vpop.f32.mrb[0].mxu0
    %178 = vmatprep.mubr.f32.mxu0 0.0
    %179 = vmatmul.mubr.f32.gmra.mrb[0].mxu0 %v59
    %v180 = vpop.f32.mrb[0].mxu0
    %v181 = vadd.f32 %v43, %v180
    %v182 = vpop.f32.mrb[0].mxu0
    %183 = vmatprep.mubr.f32.mxu0 0.0
    %184 = vmatmul.mubr.f32.gmra.mrb[0].mxu0 %v62
    %v185 = vpop.f32.mrb[0].mxu0
    %v186 = vadd.f32 %v43, %v185
    %v187 = vpop.f32.mrb[0].mxu0
    %188 = vmatprep.mubr.f32.mxu0 0.0
    %189 = vmatmul.mubr.f32.gmra.mrb[0].mxu0 %v65
    %v190 = vpop.f32.mrb[0].mxu0
    %v191 = vadd.f32 %v43, %v190
    %v192 = vpop.f32.mrb[0].mxu0
    %193 = vmatprep.mubr.f32.mxu0 0.0
    %194 = vmatmul.mubr.f32.gmra.mrb[0].mxu0 %v68
    %v195 = vpop.f32.mrb[0].mxu0
    %v196 = vadd.f32 %v43, %v195
    %v197 = vpop.f32.mrb[0].mxu0
    %198 = vmatprep.mubr.f32.mxu0 0.0
    %199 = vmatmul.mubr.f32.gmra.mrb[0].mxu0 %v71
    %v200 = vpop.f32.mrb[0].mxu0
    %v201 = vadd.f32 %v43, %v200
    %v202 = vpop.f32.mrb[0].mxu0
    %203 = vmatprep.mubr.f32.mxu0 0.0
    %204 = vmatmul.mubr.f32.gmra.mrb[0].mxu0 %v74
    %v205 = vpop.f32.mrb[0].mxu0
    %v206 = vadd.f32 %v43, %v205
    %v207 = vpop.f32.mrb[0].mxu0
    %208 = vmatprep.mubr.f32.mxu0 0.0
    %209 = vmatmul.mubr.f32.gmra.mrb[0].mxu0 %v77
    %v210 = vpop.f32.mrb[0].mxu0
    %v211 = vadd.f32 %v43, %v210
    %v212 = vpop.f32.mrb[0].mxu0
    %213 = vmatprep.mubr.f32.mxu0 0.0
    %214 = vmatmul.mubr.f32.gmra.mrb[0].mxu0 %v80
    %v215 = vpop.f32.mrb[0].mxu0
    %v216 = vadd.f32 %v43, %v215
    %v217 = vpop.f32.mrb[0].mxu0
    %218 = vmatprep.mubr.f32.mxu0 0.0
    %219 = vmatmul.mubr.f32.gmra.mrb[0].mxu0 %v83
    %v220 = vpop.f32.mrb[0].mxu0
    %v221 = vadd.f32 %v43, %v220
    %v222 = vpop.f32.mrb[0].mxu0
    %223 = vmatprep.mubr.f32.mxu0 0.0
    %224 = vmatmul.mubr.f32.gmra.mrb[0].mxu0 %v86
    %v225 = vpop.f32.mrb[0].mxu0
    %v226 = vadd.f32 %v43, %v225
    %v227 = vpop.f32.mrb[0].mxu0
    %228 = vmatprep.mubr.f32.mxu0 0.0
    %229 = vmatmul.mubr.f32.gmra.mrb[0].mxu0 %v89
    %v230 = vpop.f32.mrb[0].mxu0
    %v231 = vadd.f32 %v43, %v230
    %v232 = vpop.f32.mrb[0].mxu0
    %233 = vmatprep.mubr.f32.mxu0 0.0
    %234 = vmatmul.mubr.f32.gmra.mrb[0].mxu0 %v92
    %v235 = vpop.f32.mrb[0].mxu0
    %v236 = vadd.f32 %v43, %v235
    %v237 = vpop.f32.mrb[0].mxu0
    %238 = vdwg.mxu0
    %239 = vst [vmem:[#allocation2] sm:$0xff] %v161
    %240 = vst [vmem:[#allocation2 + $0x8] sm:$0xff] %v166
    %241 = vst [vmem:[#allocation2 + $0x10] sm:$0xff] %v171
    %242 = vst [vmem:[#allocation2 + $0x18] sm:$0xff] %v176
    %243 = vst [vmem:[#allocation2 + $0x20] sm:$0xff] %v181
    %244 = vst [vmem:[#allocation2 + $0x28] sm:$0xff] %v186
    %245 = vst [vmem:[#allocation2 + $0x30] sm:$0xff] %v191
    %246 = vst [vmem:[#allocation2 + $0x38] sm:$0xff] %v196
    %247 = vst [vmem:[#allocation2 + $0x40] sm:$0xff] %v201
    %248 = vst [vmem:[#allocation2 + $0x48] sm:$0xff] %v206
    %249 = vst [vmem:[#allocation2 + $0x50] sm:$0xff] %v211
    %250 = vst [vmem:[#allocation2 + $0x58] sm:$0xff] %v216
    %251 = vst [vmem:[#allocation2 + $0x60] sm:$0xff] %v221
    %252 = vst [vmem:[#allocation2 + $0x68] sm:$0xff] %v226
    %253 = vst [vmem:[#allocation2 + $0x70] sm:$0xff] %v231
    %254 = vst [vmem:[#allocation2 + $0x78] sm:$0xff] %v236
    // Predicated region
    $region14: #{tpu_custom_call.1} parent=1 // pred_check
      _
    $region15: #{tpu_custom_call.1} parent=1 // pred_check_branch
      %256 = sbr.rel (0) target = $region17
    $region16: #{tpu_custom_call.1} parent=1 // pred_region
      %s258 = ssub.s32 2048, 2048
      %259 = vsyncadd [#allocation3], %s258
      %s260 = sshll.u32 [#allocation2], 4
      %s261 = int_to_ptr.vmem [resolvable:$true] %s260
      %266 = dma.vmem_to_hbm [thread:$0]  %s261, 2048, %s3, [#allocation3], 128, 128, 8
    $region17: #{tpu_custom_call.1} parent=1 // pred_fallthru
      _
    // Predicated region
    $region18: #{tpu_custom_call.1} parent=1 // pred_check
      _
    $region19: #{tpu_custom_call.1} parent=1 // pred_check_branch
      %268 = sbr.rel (0) target = $region21
    $region20: #{tpu_custom_call.1} parent=1 // pred_region
      %269 = dma.done [#allocation3], 2048
    $region21: #{tpu_custom_call.1} parent=1 // pred_fallthru
      _
    %270 = vsyncpa [#allocation3], 1

</llo_original>
